<compile_context>
chip_gen: v7x
topology: tpu7x:2x2x1
jax: 0.10.0
libtpu: 0.0.40
codegen_flags: <defaults>
</compile_context>

<pallas_src>
import functools

import jax
import jax.numpy as jnp
from jax.experimental import pallas as pl
from jax.experimental.pallas import tpu as pltpu


# ----------------------------- fused kernel ----------------------------------

def _fused_mlp_kernel(*refs, n_layers, modes, n_sub, sub):
    """refs = (x_ref, w_0..w_{L-1}, b_0..b_{L-1}, out_ref).

    Layout (feature-major, batch on the lane axis):
      x_ref : (K0,  tm)     input coords for this batch tile
      w_i   : (N_i, K_i)    ["vpu_smallk"/"mxu"]  or  (K_i, 1) ["reduce_n1"]
      b_i   : (N_i, 1)
      out   : (N_L, tm)     lane-dense output row(s)

    modes[i]:
      "vpu_smallk" : tiny K  -> sum of rank-1 products on the VPU
      "reduce_n1"  : N == 1  -> elementwise multiply + sublane reduce (XLU)
      "mxu"        : regular jnp.dot(W, A) on the MXU

    The tile is processed as `n_sub` independent lane sub-tiles of width `sub`
    (128-aligned) so the VLIW packer can overlap EUP(tanh)/MXU/VPU work of the
    two chains.
    """
    x_ref = refs[0]
    w_refs = refs[1:1 + n_layers]
    b_refs = refs[1 + n_layers:1 + 2 * n_layers]
    o_ref = refs[1 + 2 * n_layers]

    # Weights / biases are VMEM-resident; load once per grid step.
    ws = [w_refs[i][...] for i in range(n_layers)]
    bs = [b_refs[i][...] for i in range(n_layers)]

    for s in range(n_sub):
        lo = s * sub                           # static, 128-aligned offset
        a = x_ref[:, lo:lo + sub]              # (K0, sub)
        for i in range(n_layers):
            w, b = ws[i], bs[i]
            mode = modes[i]
            if mode == "vpu_smallk":
                # Tiny K (input coords): sum of rank-1 outer products.
                # a[k:k+1, :] is a stride-0 sublane broadcast, w[:, k:k+1] a
                # lane broadcast -> pure VPU work, no near-empty MXU pass.
                K = w.shape[1]
                z = w[:, 0:1] * a[0:1, :]
                for k in range(1, K):
                    z = z + w[:, k:k + 1] * a[k:k + 1, :]
            elif mode == "reduce_n1":
                # Single output row: weight arrives as a (K, 1) column.
                # Elementwise multiply + cross-sublane reduce -> (1, sub).
                z = jnp.sum(w * a, axis=0, keepdims=True)
            else:
                # Regular hidden-layer contraction on the MXU.
                z = jnp.dot(w, a, preferred_element_type=jnp.float32)
            z = z + b
            a = jnp.tanh(z) if i < n_layers - 1 else z
        # Lane-dense store: (N_out, sub) row slab (single HBM write per sub-tile).
        o_ref[:, lo:lo + sub] = a.astype(o_ref.dtype)


# ------------------------------- wrapper --------------------------------------

def _choose_tiling(M):
    """Return (tm, M_pad): lane-tile width and padded batch size.

    Batch maps to the LANE axis, so tiles are multiples of 128 (or the whole
    small batch).  For M > 256 we guarantee >= 2 grid steps (v7x megacore) and
    cap tm at 512 so two live (32, tm) f32 activations stay well inside the
    64-vreg file (16 vregs each).  The batch is padded instead of ever falling
    back to one giant block.
    """
    LANE = 128
    if M <= 2 * LANE:
        return M, M                                   # single tile == full batch
    tm = min(512, pl.cdiv(M, 2 * LANE) * LANE)        # multiple of 128, >= 2 tiles
    M_pad = pl.cdiv(M, tm) * tm
    return tm, M_pad


def mlp_forward(x, weights, biases, ub, lb):
    """Fused Pallas forward pass of the iPINN mlp (single pallas_call).

    weights[i]: (out_i, in_i)   -- PyTorch nn.Linear layout
    biases[i] : (out_i,)
    Semantics match the reference: a = (x - ub) / (ub - lb), then tanh-MLP.
    The normalization is folded into layer 0 here (multiply-by-reciprocal
    instead of divide; agrees with the reference to ~1e-7 relative).
    """
    x = jnp.asarray(x, jnp.float32)
    M, K0 = x.shape
    n_layers = len(weights)
    N_out = weights[-1].shape[0]

    ub_v = jnp.asarray(ub, jnp.float32).reshape(-1)
    lb_v = jnp.asarray(lb, jnp.float32).reshape(-1)
    inv = 1.0 / (ub_v - lb_v)

    w_list = [jnp.asarray(w, jnp.float32) for w in weights]
    b_list = [jnp.asarray(b, jnp.float32).reshape(-1) for b in biases]

    # Fold  a0 = (x - ub) * inv  into layer 0:  W0' = W0 * inv ;  b0' = b0 - W0' @ ub
    w_list[0] = w_list[0] * inv[None, :]
    b_list[0] = b_list[0] - w_list[0] @ ub_v

    # Per-layer lowering mode + (possibly transposed) weight layout.
    modes, w_inputs = [], []
    for w in w_list:
        N, K = w.shape
        if K <= 8:
            modes.append("vpu_smallk"); w_inputs.append(w)       # (N, K)
        elif N == 1:
            modes.append("reduce_n1");  w_inputs.append(w.T)     # (K, 1) column
        else:
            modes.append("mxu");        w_inputs.append(w)       # (N, K)
    modes = tuple(modes)
    b_cols = [b.reshape(-1, 1) for b in b_list]                  # (N_i, 1)

    tm, M_pad = _choose_tiling(M)
    grid = (M_pad // tm,)
    n_sub = 2 if tm % 256 == 0 else 1       # 2 independent EUP/MXU chains per step
    sub = tm // n_sub

    # Transposed, lane-dense input: (K0, M_pad), batch on lanes; pad ragged tail.
    xt = x.T
    if M_pad != M:
        xt = jnp.pad(xt, ((0, 0), (0, M_pad - M)))

    in_specs = [pl.BlockSpec((K0, tm), lambda i: (0, i))]        # input batch tile
    for w in w_inputs:                                           # VMEM-resident
        in_specs.append(pl.BlockSpec(w.shape, lambda i: (0, 0)))
    for b in b_cols:
        in_specs.append(pl.BlockSpec(b.shape, lambda i: (0, 0)))

    kernel = functools.partial(_fused_mlp_kernel, n_layers=n_layers,
                               modes=modes, n_sub=n_sub, sub=sub)

    out_t = pl.pallas_call(
        kernel,
        out_shape=jax.ShapeDtypeStruct((N_out, M_pad), jnp.float32),
        grid_spec=pltpu.PrefetchScalarGridSpec(
            num_scalar_prefetch=0,
            grid=grid,
            in_specs=in_specs,
            out_specs=pl.BlockSpec((N_out, tm), lambda i: (0, i)),
        ),
        compiler_params=pltpu.CompilerParams(
            dimension_semantics=("parallel",),   # batch tiles shard across v7x's 2 TCs
        ),
    )(xt, *w_inputs, *b_cols)

    # Free layout plumbing: slice off padding, back to (M, N_out).
    return out_t[:, :M].T


# ------------------------- parameter construction -----------------------------

def init_mlp_params(layers, key):
    """Xavier-normal weights (gain=1), zero biases — matches the module __init__.
    Weights stored in PyTorch nn.Linear layout: (out_features, in_features)."""
    weights, biases = [], []
    for i in range(len(layers) - 1):
        fan_in, fan_out = layers[i], layers[i + 1]
        key, sub = jax.random.split(key)
        std = (2.0 / (fan_in + fan_out)) ** 0.5
        w = std * jax.random.normal(sub, (fan_out, fan_in), dtype=jnp.float32)
        b = jnp.zeros((fan_out,), dtype=jnp.float32)
        weights.append(w)
        biases.append(b)
    return weights, biases


def mlp_reference(x, weights, biases, ub, lb):
    """Pure-JAX reference with the exact module semantics (divide, not reciprocal)."""
    ub = jnp.asarray(ub, jnp.float32).reshape(1, -1)
    lb = jnp.asarray(lb, jnp.float32).reshape(1, -1)
    a = (x - ub) / (ub - lb)
    for i in range(len(weights) - 1):
        a = jnp.tanh(a @ weights[i].T + biases[i])
    return a @ weights[-1].T + biases[-1]


# -------------------------------- main ----------------------------------------

if __name__ == "__main__":
    layers = [2, 32, 32, 1]          # typical PINN architecture: (x, t) -> u
    ub = jnp.array([1.0, 1.0], dtype=jnp.float32)    # upper bound per input feature
    lb = jnp.array([-1.0, 0.0], dtype=jnp.float32)   # lower bound per input feature

    key = jax.random.PRNGKey(0)
    key, kp = jax.random.split(key)
    weights, biases = init_mlp_params(layers, kp)

    # batch=32: small single-tile path; batch=1000: padded multi-tile path
    # (tm=512, grid=2, 2 sub-tiles) to exercise the tiled/padded code path.
    for batch in (32, 1000):
        key, kx = jax.random.split(key)
        x = jax.random.uniform(kx, (batch, layers[0]), dtype=jnp.float32,
                               minval=-1.0, maxval=1.0)
        out = jax.block_until_ready(mlp_forward(x, weights, biases, ub, lb))
        ref = mlp_reference(x, weights, biases, ub, lb)
        assert out.shape == (batch, layers[-1])
        assert jnp.allclose(out, ref, rtol=1e-4, atol=1e-5), (
            "max abs err:", float(jnp.max(jnp.abs(out - ref))))

    print("KERNEL_OK")
</pallas_src>

<mosaic_0001>
module attributes {stable_mosaic.version = 11 : i64} {
  func.func @_fused_mlp_kernel(%arg0: i32, %arg1: memref<2x32xf32, #tpu.memory_space<vmem>>, %arg2: memref<32x2xf32, #tpu.memory_space<vmem>>, %arg3: memref<32x32xf32, #tpu.memory_space<vmem>>, %arg4: memref<32x1xf32, #tpu.memory_space<vmem>>, %arg5: memref<32x1xf32, #tpu.memory_space<vmem>>, %arg6: memref<32x1xf32, #tpu.memory_space<vmem>>, %arg7: memref<1x1xf32, #tpu.memory_space<vmem>>, %arg8: memref<1x32xf32, #tpu.memory_space<vmem>>) attributes {dimension_semantics = [#tpu.dimension_semantics<parallel>], iteration_bounds = array<i64: 1>, scalar_prefetch = 0 : i64, scratch_operands = 0 : i64, tpu.core_type = #tpu.core_type<tc>, window_params = [{transform_indices = @transform_0, window_bounds = array<i64: 2, 32>}, {pipeline_mode = #tpu.pipeline_mode<synchronous>, transform_indices = @transform_1, window_bounds = array<i64: 32, 2>}, {pipeline_mode = #tpu.pipeline_mode<synchronous>, transform_indices = @transform_2, window_bounds = array<i64: 32, 32>}, {pipeline_mode = #tpu.pipeline_mode<synchronous>, transform_indices = @transform_3, window_bounds = array<i64: 32, 1>}, {pipeline_mode = #tpu.pipeline_mode<synchronous>, transform_indices = @transform_4, window_bounds = array<i64: 32, 1>}, {pipeline_mode = #tpu.pipeline_mode<synchronous>, transform_indices = @transform_5, window_bounds = array<i64: 32, 1>}, {pipeline_mode = #tpu.pipeline_mode<synchronous>, transform_indices = @transform_6, window_bounds = array<i64: 1, 1>}, {transform_indices = @transform_7, window_bounds = array<i64: 1, 32>}]} {
    %c0 = arith.constant 0 : index
    %c0_0 = arith.constant 0 : index
    %0 = vector.load %arg2[%c0, %c0_0] : memref<32x2xf32, #tpu.memory_space<vmem>>, vector<32x2xf32>
    %c0_1 = arith.constant 0 : index
    %c0_2 = arith.constant 0 : index
    %1 = vector.load %arg3[%c0_1, %c0_2] : memref<32x32xf32, #tpu.memory_space<vmem>>, vector<32x32xf32>
    %c0_3 = arith.constant 0 : index
    %c0_4 = arith.constant 0 : index
    %2 = vector.load %arg4[%c0_3, %c0_4] : memref<32x1xf32, #tpu.memory_space<vmem>>, vector<32x1xf32>
    %c0_5 = arith.constant 0 : index
    %c0_6 = arith.constant 0 : index
    %3 = vector.load %arg5[%c0_5, %c0_6] : memref<32x1xf32, #tpu.memory_space<vmem>>, vector<32x1xf32>
    %c0_7 = arith.constant 0 : index
    %c0_8 = arith.constant 0 : index
    %4 = vector.load %arg6[%c0_7, %c0_8] : memref<32x1xf32, #tpu.memory_space<vmem>>, vector<32x1xf32>
    %c0_9 = arith.constant 0 : index
    %c0_10 = arith.constant 0 : index
    %5 = vector.load %arg7[%c0_9, %c0_10] : memref<1x1xf32, #tpu.memory_space<vmem>>, vector<1x1xf32>
    %c0_11 = arith.constant 0 : index
    %c0_12 = arith.constant 0 : index
    %6 = vector.load %arg1[%c0_11, %c0_12] : memref<2x32xf32, #tpu.memory_space<vmem>>, vector<2x32xf32>
    %7 = vector.extract_strided_slice %0 {offsets = [0, 0], sizes = [32, 1], strides = [1, 1]} : vector<32x2xf32> to vector<32x1xf32>
    %8 = vector.extract_strided_slice %6 {offsets = [0, 0], sizes = [1, 32], strides = [1, 1]} : vector<2x32xf32> to vector<1x32xf32>
    %9 = vector.broadcast %7 : vector<32x1xf32> to vector<32x32xf32>
    %10 = vector.broadcast %8 : vector<1x32xf32> to vector<32x32xf32>
    %11 = arith.mulf %9, %10 : vector<32x32xf32>
    %12 = vector.extract_strided_slice %0 {offsets = [0, 1], sizes = [32, 1], strides = [1, 1]} : vector<32x2xf32> to vector<32x1xf32>
    %13 = vector.extract_strided_slice %6 {offsets = [1, 0], sizes = [1, 32], strides = [1, 1]} : vector<2x32xf32> to vector<1x32xf32>
    %14 = vector.broadcast %12 : vector<32x1xf32> to vector<32x32xf32>
    %15 = vector.broadcast %13 : vector<1x32xf32> to vector<32x32xf32>
    %16 = arith.mulf %14, %15 : vector<32x32xf32>
    %17 = arith.addf %11, %16 : vector<32x32xf32>
    %18 = vector.broadcast %3 : vector<32x1xf32> to vector<32x32xf32>
    %19 = arith.addf %17, %18 : vector<32x32xf32>
    %20 = math.tanh %19 : vector<32x32xf32>
    %cst = arith.constant dense<0.000000e+00> : vector<32x32xf32>
    %21 = tpu.matmul %1, %20, %cst {dimension_numbers = #tpu.dot_dimension_numbers<[1], [0], [0], [1], [0, 0, 1, 1], [], []>} : vector<32x32xf32>, vector<32x32xf32>, vector<32x32xf32> -> vector<32x32xf32>
    %22 = vector.broadcast %4 : vector<32x1xf32> to vector<32x32xf32>
    %23 = arith.addf %21, %22 : vector<32x32xf32>
    %24 = math.tanh %23 : vector<32x32xf32>
    %25 = vector.broadcast %2 : vector<32x1xf32> to vector<32x32xf32>
    %26 = arith.mulf %25, %24 : vector<32x32xf32>
    %cst_13 = arith.constant dense<0.000000e+00> : vector<32xf32>
    %27 = vector.multi_reduction <add>, %26, %cst_13 [0] : vector<32x32xf32> to vector<32xf32>
    %28 = vector.shape_cast %27 : vector<32xf32> to vector<1x32xf32>
    %29 = vector.broadcast %5 : vector<1x1xf32> to vector<1x32xf32>
    %30 = arith.addf %28, %29 : vector<1x32xf32>
    %c0_14 = arith.constant 0 : index
    %c0_15 = arith.constant 0 : index
    %31 = vector.load %arg8[%c0_14, %c0_15] : memref<1x32xf32, #tpu.memory_space<vmem>>, vector<1x32xf32>
    tpu.vector_store %arg8[%c0_14, %c0_15], %30 {strides = array<i32>} : memref<1x32xf32, #tpu.memory_space<vmem>>, vector<1x32xf32>,
    return
  }
  func.func @transform_0(%arg0: i32) -> (i32, i32) {
    %c0_i32 = arith.constant 0 : i32
    %c0_i32_0 = arith.constant 0 : i32
    return %c0_i32, %arg0 : i32, i32
  }
  func.func @transform_1(%arg0: i32) -> (i32, i32) {
    %c0_i32 = arith.constant 0 : i32
    %c0_i32_0 = arith.constant 0 : i32
    %c0_i32_1 = arith.constant 0 : i32
    return %c0_i32, %c0_i32_0 : i32, i32
  }
  func.func @transform_2(%arg0: i32) -> (i32, i32) {
    %c0_i32 = arith.constant 0 : i32
    %c0_i32_0 = arith.constant 0 : i32
    %c0_i32_1 = arith.constant 0 : i32
    return %c0_i32, %c0_i32_0 : i32, i32
  }
  func.func @transform_3(%arg0: i32) -> (i32, i32) {
    %c0_i32 = arith.constant 0 : i32
    %c0_i32_0 = arith.constant 0 : i32
    %c0_i32_1 = arith.constant 0 : i32
    return %c0_i32, %c0_i32_0 : i32, i32
  }
  func.func @transform_4(%arg0: i32) -> (i32, i32) {
    %c0_i32 = arith.constant 0 : i32
    %c0_i32_0 = arith.constant 0 : i32
    %c0_i32_1 = arith.constant 0 : i32
    return %c0_i32, %c0_i32_0 : i32, i32
  }
  func.func @transform_5(%arg0: i32) -> (i32, i32) {
    %c0_i32 = arith.constant 0 : i32
    %c0_i32_0 = arith.constant 0 : i32
    %c0_i32_1 = arith.constant 0 : i32
    return %c0_i32, %c0_i32_0 : i32, i32
  }
  func.func @transform_6(%arg0: i32) -> (i32, i32) {
    %c0_i32 = arith.constant 0 : i32
    %c0_i32_0 = arith.constant 0 : i32
    %c0_i32_1 = arith.constant 0 : i32
    return %c0_i32, %c0_i32_0 : i32, i32
  }
  func.func @transform_7(%arg0: i32) -> (i32, i32) {
    %c0_i32 = arith.constant 0 : i32
    %c0_i32_0 = arith.constant 0 : i32
    return %c0_i32, %arg0 : i32, i32
  }
}

</mosaic_0001>

<llo_original>
// kernel: tpu_custom_call.1
$region0: #{tpu_custom_call.1}
  #allocation0 [shape = 'u32[]', space=smem, size = 0x4, offset = 0x4, fixed_abs, tag = 'smem constant byte address 0x4 - core index']
  #allocation1 [shape = 'u32[144,128]{1,0:T(1,128)}', space=vmem, size = 0x12000, scoped, tag = 'internal scratch']
  #allocation2 [shape = 'f32[1,1]{1,0:T(1,128)S(1)}', space=vmem, size = 0x200, scoped, tag = 'scoped memory for tpu_custom_call.1']
  %s0 = inlined_call_operand.vmem [shape: f32[2,32], index: 0, kind: input, shape index: {}]
  %s1 = inlined_call_operand.vmem [shape: f32[32,2], index: 1, kind: input, shape index: {}]
  %s2 = inlined_call_operand.vmem [shape: f32[32,32], index: 2, kind: input, shape index: {}]
  %s3 = inlined_call_operand.vmem [shape: f32[32,1], index: 3, kind: input, shape index: {}]
  %s4 = inlined_call_operand.vmem [shape: f32[32,1], index: 4, kind: input, shape index: {}]
  %s5 = inlined_call_operand.vmem [shape: f32[32,1], index: 5, kind: input, shape index: {}]
  %s6 = inlined_call_operand.<no memory space> [shape: f32[1,1], index: 6, kind: input, shape index: {}]
  %s7 = inlined_call_operand.hbm [shape: f32[1,32], index: 7, kind: output, shape index: {}]
  %s8 = sld [smem:[#allocation0]]
  $region38: #{tpu_custom_call.1} parent=0
    _
  %s10 = ssub.s32 1, %s8
  %s11 = scalar_select 0, %s10, %s8
  %v12 = vstv %s6
  %13 = vst [vmem:[#allocation2] sm:$0x1] %v12
  $region1: #{tpu_custom_call.1} parent=0
    #allocation3 [shape = 'u8[512]{0}', space=vmem, size = 0x400, scoped, tag = 'output window, operand 0, single buffered']
    #allocation4 [shape = 's32[1]{0}', space=sflag, size = 0x4, scoped, tag = 'scoped memory for tpu_custom_call.1']
    %14 = vsyncpa [#allocation4], 0
    // Predicated region
    $region2: #{tpu_custom_call.1} parent=1 // pred_check
      _
    $region3: #{tpu_custom_call.1} parent=1 // pred_check_branch
      %16 = sbr.rel (0) target = $region5
    $region4: #{tpu_custom_call.1} parent=1 // pred_region
      _
    $region5: #{tpu_custom_call.1} parent=1 // pred_fallthru
      _
    // Predicated region
    $region6: #{tpu_custom_call.1} parent=1 // pred_check
      _
    $region7: #{tpu_custom_call.1} parent=1 // pred_check_branch
      %18 = sbr.rel (0) target = $region9
    $region8: #{tpu_custom_call.1} parent=1 // pred_region
      _
    $region9: #{tpu_custom_call.1} parent=1 // pred_fallthru
      _
    // Predicated region
    $region10: #{tpu_custom_call.1} parent=1 // pred_check
      _
    $region11: #{tpu_custom_call.1} parent=1 // pred_check_branch
      %20 = sbr.rel (0) target = $region13
    $region12: #{tpu_custom_call.1} parent=1 // pred_region
      _
    $region13: #{tpu_custom_call.1} parent=1 // pred_fallthru
      _
    // Predicated region
    $region14: #{tpu_custom_call.1} parent=1 // pred_check
      _
    $region15: #{tpu_custom_call.1} parent=1 // pred_check_branch
      %22 = sbr.rel (0) target = $region17
    $region16: #{tpu_custom_call.1} parent=1 // pred_region
      _
    $region17: #{tpu_custom_call.1} parent=1 // pred_fallthru
      _
    // Predicated region
    $region18: #{tpu_custom_call.1} parent=1 // pred_check
      _
    $region19: #{tpu_custom_call.1} parent=1 // pred_check_branch
      %24 = sbr.rel (0) target = $region21
    $region20: #{tpu_custom_call.1} parent=1 // pred_region
      _
    $region21: #{tpu_custom_call.1} parent=1 // pred_fallthru
      _
    // Predicated region
    $region22: #{tpu_custom_call.1} parent=1 // pred_check
      _
    $region23: #{tpu_custom_call.1} parent=1 // pred_check_branch
      %26 = sbr.rel (0) target = $region25
    $region24: #{tpu_custom_call.1} parent=1 // pred_region
      _
    $region25: #{tpu_custom_call.1} parent=1 // pred_fallthru
      _
    // Predicated region
    $region26: #{tpu_custom_call.1} parent=1 // pred_check
      _
    $region27: #{tpu_custom_call.1} parent=1 // pred_check_branch
      %28 = sbr.rel (0) target = $region29
    $region28: #{tpu_custom_call.1} parent=1 // pred_region
      _
    $region29: #{tpu_custom_call.1} parent=1 // pred_fallthru
      _
    %v29 = vld [vmem:[%s1] sm:$0xff]
    %v30 = vld [vmem:[%s1 + $0x8] sm:$0xff]
    %v31 = vld [vmem:[%s1 + $0x10] sm:$0xff]
    %v32 = vld [vmem:[%s1 + $0x18] sm:$0xff]
    %v33 = vld [vmem:[%s2] sm:$0xff]
    %v34 = vld [vmem:[%s2 + $0x8] sm:$0xff]
    %v35 = vld [vmem:[%s2 + $0x10] sm:$0xff]
    %v36 = vld [vmem:[%s2 + $0x18] sm:$0xff]
    %v37 = vld [vmem:[%s3] sm:$0xff]
    %v38 = vld [vmem:[%s3 + $0x8] sm:$0xff]
    %v39 = vld [vmem:[%s3 + $0x10] sm:$0xff]
    %v40 = vld [vmem:[%s3 + $0x18] sm:$0xff]
    %v41 = vld [vmem:[%s4] sm:$0xff]
    %v42 = vld [vmem:[%s4 + $0x8] sm:$0xff]
    %v43 = vld [vmem:[%s4 + $0x10] sm:$0xff]
    %v44 = vld [vmem:[%s4 + $0x18] sm:$0xff]
    %v45 = vld [vmem:[%s5] sm:$0xff]
    %v46 = vld [vmem:[%s5 + $0x8] sm:$0xff]
    %v47 = vld [vmem:[%s5 + $0x10] sm:$0xff]
    %v48 = vld [vmem:[%s5 + $0x18] sm:$0xff]
    %v49 = vld [vmem:[#allocation2] sm:$0x1]
    %v50 = vld [vmem:[%s0] sm:$0x3]
    %52 = vset.pattern.permute.xlu0 0
    %53 = vperm.xlu0 %52, %v29
    %v54 = vpop.permute.xlu0 %53
    %57 = vset.pattern.permute.xlu0 0
    %58 = vperm.xlu0 %57, %v30
    %v59 = vpop.permute.xlu0 %58
    %62 = vset.pattern.permute.xlu0 0
    %63 = vperm.xlu0 %62, %v31
    %v64 = vpop.permute.xlu0 %63
    %67 = vset.pattern.permute.xlu0 0
    %68 = vperm.xlu0 %67, %v32
    %v69 = vpop.permute.xlu0 %68
    %v71 = vlaneseq
    %v72 = vshrl.u32 %v71, 7
    %v73 = vsub.s32 0, %v72
    %v74 = vrot.slane %v50, %v73
    %v75 = vmul.f32 %v54, %v74
    %v76 = vmul.f32 %v59, %v74
    %v77 = vmul.f32 %v64, %v74
    %v78 = vmul.f32 %v69, %v74
    %79 = vset.pattern.permute.xlu0 1
    %80 = vperm.xlu0 %79, %v29
    %v81 = vpop.permute.xlu0 %80
    %83 = vset.pattern.permute.xlu0 1
    %84 = vperm.xlu0 %83, %v30
    %v85 = vpop.permute.xlu0 %84
    %87 = vset.pattern.permute.xlu0 1
    %88 = vperm.xlu0 %87, %v31
    %v89 = vpop.permute.xlu0 %88
    %91 = vset.pattern.permute.xlu0 1
    %92 = vperm.xlu0 %91, %v32
    %v93 = vpop.permute.xlu0 %92
    %v95 = vlaneseq
    %v96 = vshrl.u32 %v95, 7
    %v97 = vsub.s32 1, %v96
    %v98 = vrot.slane %v50, %v97
    %v99 = vmul.f32 %v81, %v98
    %v100 = vmul.f32 %v85, %v98
    %v101 = vmul.f32 %v89, %v98
    %v102 = vmul.f32 %v93, %v98
    %v103 = vadd.f32 %v75, %v99
    %v104 = vadd.f32 %v76, %v100
    %v105 = vadd.f32 %v77, %v101
    %v106 = vadd.f32 %v78, %v102
    %108 = vset.pattern.permute.xlu0 0
    %109 = vperm.xlu0 %108, %v41
    %v110 = vpop.permute.xlu0 %109
    %113 = vset.pattern.permute.xlu0 0
    %114 = vperm.xlu0 %113, %v42
    %v115 = vpop.permute.xlu0 %114
    %118 = vset.pattern.permute.xlu0 0
    %119 = vperm.xlu0 %118, %v43
    %v120 = vpop.permute.xlu0 %119
    %123 = vset.pattern.permute.xlu0 0
    %124 = vperm.xlu0 %123, %v44
    %v125 = vpop.permute.xlu0 %124
    %v127 = vadd.f32 %v103, %v110
    %v128 = vadd.f32 %v104, %v115
    %v129 = vadd.f32 %v105, %v120
    %v130 = vadd.f32 %v106, %v125
    %v131 = vtanh.pop %v127
    %v132 = vtanh.pop %v128
    %v133 = vtanh.pop %v129
    %v134 = vtanh.pop %v130
    %136 = vset.pattern.permute.xlu0 0
    %137 = vperm.xlu0 %136, %v45
    %v138 = vpop.permute.xlu0 %137
    %141 = vset.pattern.permute.xlu0 0
    %142 = vperm.xlu0 %141, %v46
    %v143 = vpop.permute.xlu0 %142
    %146 = vset.pattern.permute.xlu0 0
    %147 = vperm.xlu0 %146, %v47
    %v148 = vpop.permute.xlu0 %147
    %151 = vset.pattern.permute.xlu0 0
    %152 = vperm.xlu0 %151, %v48
    %v153 = vpop.permute.xlu0 %152
    %vm155 = vcmask 261120
    %v157 = vsel %vm155, %v33, 0
    %v160 = vsel %vm155, %v34, 0
    %v163 = vsel %vm155, %v35, 0
    %v166 = vsel %vm155, %v36, 0
    %168 = vmatprep.subr.mxu0 0.0
    %169 = vmatpush1.msra.mxu0 %v131
    %170 = vmatprep.subr.mxu0 0.0
    %171 = vmatpush1.msra.mxu0 %v132
    %172 = vmatprep.subr.mxu0 0.0
    %173 = vmatpush1.msra.mxu0 %v133
    %174 = vmatprep.subr.mxu0 0.0
    %175 = vmatpush1.msra.mxu0 %v134
    %176 = vmatprep.subr.mxu0 0.0
    %177 = vmatpush1.msra.mxu0 0.0
    %178 = vmatprep.subr.mxu0 0.0
    %179 = vmatpush1.msra.mxu0 0.0
    %180 = vmatprep.subr.mxu0 0.0
    %181 = vmatpush1.msra.mxu0 0.0
    %182 = vmatprep.subr.mxu0 0.0
    %183 = vmatpush1.msra.mxu0 0.0
    %184 = vmatprep.subr.mxu0 0.0
    %185 = vmatpush1.msra.mxu0 0.0
    %186 = vmatprep.subr.mxu0 0.0
    %187 = vmatpush1.msra.mxu0 0.0
    %188 = vmatprep.subr.mxu0 0.0
    %189 = vmatpush1.msra.mxu0 0.0
    %190 = vmatprep.subr.mxu0 0.0
    %191 = vmatpush1.msra.mxu0 0.0
    %192 = vmatprep.subr.mxu0 0.0
    %193 = vmatpush1.msra.mxu0 0.0
    %194 = vmatprep.subr.mxu0 0.0
    %195 = vmatpush1.msra.mxu0 0.0
    %196 = vmatprep.subr.mxu0 0.0
    %197 = vmatpush1.msra.mxu0 0.0
    %198 = vmatprep.subr.mxu0 0.0
    %199 = vmatpush1.msra.mxu0 0.0
    %200 = vmatprep.subr.mxu0 0.0
    %201 = vmatpush1.msra.mxu0 0.0
    %202 = vmatprep.subr.mxu0 0.0
    %203 = vmatpush1.msra.mxu0 0.0
    %204 = vmatprep.subr.mxu0 0.0
    %205 = vmatpush1.msra.mxu0 0.0
    %206 = vmatprep.subr.mxu0 0.0
    %207 = vmatpush1.msra.mxu0 0.0
    %208 = vmatprep.subr.mxu0 0.0
    %209 = vmatpush1.msra.mxu0 0.0
    %210 = vmatprep.subr.mxu0 0.0
    %211 = vmatpush1.msra.mxu0 0.0
    %212 = vmatprep.subr.mxu0 0.0
    %213 = vmatpush1.msra.mxu0 0.0
    %214 = vmatprep.subr.mxu0 0.0
    %215 = vmatpush1.msra.mxu0 0.0
    %216 = vmatprep.subr.mxu0 0.0
    %217 = vmatpush1.msra.mxu0 0.0
    %218 = vmatprep.subr.mxu0 0.0
    %219 = vmatpush1.msra.mxu0 0.0
    %220 = vmatprep.subr.mxu0 0.0
    %221 = vmatpush1.msra.mxu0 0.0
    %222 = vmatprep.subr.mxu0 0.0
    %223 = vmatpush1.msra.mxu0 0.0
    %224 = vmatprep.subr.mxu0 0.0
    %225 = vmatpush1.msra.mxu0 0.0
    %226 = vmatprep.subr.mxu0 0.0
    %227 = vmatpush1.msra.mxu0 0.0
    %228 = vmatprep.subr.mxu0 0.0
    %229 = vmatpush1.msra.mxu0 0.0
    %230 = vmatprep.subr.mxu0 0.0
    %231 = vmatpush1.msra.mxu0 0.0
    %232 = vmatprep.mubr.f32.mxu0 0.0
    %233 = vmatmul.mubr.f32.gmra.mrb[0].mxu0 %v157
    %v234 = vpop.f32.mrb[0].mxu0
    %v235 = vadd.f32 %v138, %v234
    %v236 = vpop.f32.mrb[0].mxu0
    %237 = vmatprep.mubr.f32.mxu0 0.0
    %238 = vmatmul.mubr.f32.gmra.mrb[0].mxu0 %v160
    %v239 = vpop.f32.mrb[0].mxu0
    %v240 = vadd.f32 %v143, %v239
    %v241 = vpop.f32.mrb[0].mxu0
    %242 = vmatprep.mubr.f32.mxu0 0.0
    %243 = vmatmul.mubr.f32.gmra.mrb[0].mxu0 %v163
    %v244 = vpop.f32.mrb[0].mxu0
    %v245 = vadd.f32 %v148, %v244
    %v246 = vpop.f32.mrb[0].mxu0
    %247 = vmatprep.mubr.f32.mxu0 0.0
    %248 = vmatmul.mubr.f32.gmra.mrb[0].mxu0 %v166
    %v249 = vpop.f32.mrb[0].mxu0
    %v250 = vadd.f32 %v153, %v249
    %v251 = vpop.f32.mrb[0].mxu0
    %252 = vdwg.mxu0
    %v253 = vtanh.pop %v235
    %v254 = vtanh.pop %v240
    %v255 = vtanh.pop %v245
    %v256 = vtanh.pop %v250
    %258 = vset.pattern.permute.xlu0 0
    %259 = vperm.xlu0 %258, %v37
    %v260 = vpop.permute.xlu0 %259
    %263 = vset.pattern.permute.xlu0 0
    %264 = vperm.xlu0 %263, %v38
    %v265 = vpop.permute.xlu0 %264
    %268 = vset.pattern.permute.xlu0 0
    %269 = vperm.xlu0 %268, %v39
    %v270 = vpop.permute.xlu0 %269
    %273 = vset.pattern.permute.xlu0 0
    %274 = vperm.xlu0 %273, %v40
    %v275 = vpop.permute.xlu0 %274
    %v277 = vmul.f32 %v260, %v253
    %v278 = vmul.f32 %v265, %v254
    %v279 = vmul.f32 %v270, %v255
    %v280 = vmul.f32 %v275, %v256
    %v281 = vsel %vm155, %v277, 0.0
    %v282 = vsel %vm155, %v278, 0.0
    %v283 = vadd.f32 %v281, %v282
    %v284 = vsel %vm155, %v279, 0.0
    %v285 = vadd.f32 %v283, %v284
    %v286 = vsel %vm155, %v280, 0.0
    %v287 = vadd.f32 %v285, %v286
    %v288 = vrot.slane %v287, 4
    %v289 = vadd.f32 %v287, %v288
    %v290 = vrot.slane %v289, 2
    %v291 = vadd.f32 %v289, %v290
    %v292 = vrot.slane %v291, 1
    %v293 = vadd.f32 %v291, %v292
    %295 = vset.pattern.permute.xlu0 0
    %296 = vperm.xlu0 %295, %v49
    %v297 = vpop.permute.xlu0 %296
    %v299 = vlaneseq
    %v300 = vshrl.u32 %v299, 7
    %v301 = vsub.s32 0, %v300
    %v302 = vrot.slane %v297, %v301
    %v303 = vadd.f32 %v293, %v302
    %vm304 = vcmask 253952
    %305 = vst.msk [vmem:[#allocation3] sm:$0x1] %vm304, %v303
    // Predicated region
    $region30: #{tpu_custom_call.1} parent=1 // pred_check
      _
    $region31: #{tpu_custom_call.1} parent=1 // pred_check_branch
      %307 = sbr.rel (0) target = $region33
    $region32: #{tpu_custom_call.1} parent=1 // pred_region
      %s309 = ssub.s32 16, 16
      %310 = vsyncadd [#allocation4], %s309
      %s312 = sshll.u32 [#allocation3], 4
      %s313 = int_to_ptr.vmem [resolvable:$true] %s312
      %315 = dma.vmem_to_hbm [thread:$0]  %s313, 16, %s7, [#allocation4]
    $region33: #{tpu_custom_call.1} parent=1 // pred_fallthru
      _
    // Predicated region
    $region34: #{tpu_custom_call.1} parent=1 // pred_check
      _
    $region35: #{tpu_custom_call.1} parent=1 // pred_check_branch
      %317 = sbr.rel (0) target = $region37
    $region36: #{tpu_custom_call.1} parent=1 // pred_region
      %318 = dma.done [#allocation4], 16
    $region37: #{tpu_custom_call.1} parent=1 // pred_fallthru
      _
    %319 = vsyncpa [#allocation4], 1

</llo_original>
